<compile_context>
chip_gen: v5e
topology: v5e:2x2
jax: 0.10.0
libtpu: 0.0.40
codegen_flags: <defaults>
</compile_context>

<pallas_src>
import numpy as np

import jax
import jax.numpy as jnp
from jax.experimental import pallas as pl
from jax.experimental.pallas import tpu as pltpu


def _perturbator_kernel(x_ref, w_ref, b_ref, s_ref, noise_ref, o_ref):
    """One lane-dense pixel tile of one batch element.

    x_ref     : (c_in,        tile_p)  input pixels, pixels on the lane axis
    w_ref     : (num_classes, c_in)    1x1-conv head weight (resident)
    b_ref     : (num_classes, 1)       bias
    s_ref     : (num_classes, n_pert)  signed one-hot scatter of perturbed classes
    noise_ref : (n_pert,      tile_p)  pre-drawn |N(0, pert_ratio)| rows
    o_ref     : (num_classes, tile_p)  perturbed logits
    """
    x = x_ref[...]
    w = w_ref[...]
    c_in = w.shape[1]
    n_pert = noise_ref.shape[0]

    # Tiny contraction (K = c_in, classes on sublanes): unrolled broadcast
    # multiply-adds on the VPU.  This op is HBM-bandwidth-bound; the MXU would
    # be <0.1% utilized at 4x8 and only adds MRF drain latency.
    acc = w[:, 0:1] * x[0:1, :]
    for c in range(1, c_in):
        acc = acc + w[:, c:c + 1] * x[c:c + 1, :]
    acc = acc + b_ref[...]

    # MultiClassPerturbator: add signed |Gaussian| noise to the perturbed class
    # rows only (static unroll over n_pert; sign & class index live in s_ref).
    noise = noise_ref[...]
    for k in range(n_pert):
        acc = acc + s_ref[:, k:k + 1] * noise[k:k + 1, :]

    o_ref[...] = acc.astype(o_ref.dtype)


def _pick_tile_p(hw, max_tile=8192):
    """Largest pixel tile <= max_tile that is a multiple of 128 and divides hw."""
    cap = min(hw, max_tile)
    for t in range(cap - cap % 128, 127, -128):
        if hw % t == 0:
            return t
    return None


def _host_noise_and_scatter(key, perturbations, num_classes, n, hw, pert_ratio):
    """Draw |N(0, pert_ratio)| rows for the perturbed classes only.

    Returns
      noise : (n, n_pert, hw) f32   abs-Gaussian, already scaled by pert_ratio
      scat  : (num_classes, n_pert) f32  signed one-hot (+1 positive, -1 negative)
    """
    n_pert = max(len(perturbations), 1)
    keys = jax.random.split(key, n_pert)
    scat = np.zeros((num_classes, n_pert), np.float32)
    rows = []
    for k, pert in enumerate(perturbations):
        sgn = 1.0 if pert.get("positive", True) else -1.0
        scat[pert["index"], k] += sgn
        rows.append(jnp.abs(jax.random.normal(keys[k], (n, hw), jnp.float32))
                    * jnp.float32(pert_ratio))
    while len(rows) < n_pert:               # no perturbations -> single zero row
        rows.append(jnp.zeros((n, hw), jnp.float32))
    return jnp.stack(rows, axis=1), jnp.asarray(scat)


def multi_class_perturbator(x_nchw, weight, bias, perturbations, pert_ratio,
                            noise_key, max_tile_p=8192):
    """x_nchw: (N, C_in, H, W) f32; weight: (num_classes, C_in); bias: (num_classes,).

    Returns (N, num_classes, H, W) f32 logits with signed |Gaussian| noise added
    to the requested class channels (MultiClassPerturbator.forward for a
    1x1-conv segmentation head).
    """
    n, c_in, h, w = x_nchw.shape
    num_classes = weight.shape[0]
    hw = h * w

    tile_p = _pick_tile_p(hw, max_tile_p)
    assert tile_p is not None, "toy wrapper assumes H*W divisible by 128"

    # Channel-major, lane-dense layout: NCHW -> (N, C, H*W).  Pure reshape, no
    # transpose, so no extra HBM round trips outside the kernel.
    x_flat = x_nchw.reshape(n, c_in, hw).astype(jnp.float32)
    w2d = weight.astype(jnp.float32)                          # (num_classes, c_in)
    b2d = bias.reshape(num_classes, 1).astype(jnp.float32)    # (num_classes, 1)

    # Host-drawn noise, perturbed classes only.
    noise, scat = _host_noise_and_scatter(noise_key, perturbations,
                                          num_classes, n, hw, pert_ratio)
    n_pert = noise.shape[1]

    out_flat = pl.pallas_call(
        _perturbator_kernel,
        out_shape=jax.ShapeDtypeStruct((n, num_classes, hw), jnp.float32),
        grid=(n, hw // tile_p),
        in_specs=[
            pl.BlockSpec((None, c_in, tile_p), lambda b, i: (b, 0, i)),    # x tile
            pl.BlockSpec((num_classes, c_in), lambda b, i: (0, 0)),        # W
            pl.BlockSpec((num_classes, 1), lambda b, i: (0, 0)),           # bias
            pl.BlockSpec((num_classes, n_pert), lambda b, i: (0, 0)),      # scatter
            pl.BlockSpec((None, n_pert, tile_p), lambda b, i: (b, 0, i)),  # noise
        ],
        out_specs=pl.BlockSpec((None, num_classes, tile_p),
                               lambda b, i: (b, 0, i)),
        compiler_params=pltpu.CompilerParams(
            # All tiles independent (no in-kernel PRNG state anymore) ->
            # safe to shard across both TensorCores on v7x; neutral on v5e/v6e.
            dimension_semantics=("parallel", "parallel")),
    )(x_flat, w2d, b2d, scat, noise)

    # (N, num_classes, H*W) -> NCHW: pure reshape again, no transpose.
    return out_flat.reshape(n, num_classes, h, w)


if __name__ == "__main__":
    N, C_IN, H, W = 2, 4, 16, 16
    NUM_CLASSES = 8
    PERT_RATIO = 0.5
    PERTURBATIONS = [{"index": 1, "positive": True},
                     {"index": 3, "positive": False}]

    key = jax.random.PRNGKey(0)
    kx, kw, kb, kn = jax.random.split(key, 4)
    x = jax.random.normal(kx, (N, C_IN, H, W), jnp.float32)
    # Synthetic wrapped "model": a 1x1-conv segmentation head
    # (PyTorch conv weight layout: (out_channels, in_channels)).
    weight = jax.random.normal(kw, (NUM_CLASSES, C_IN), jnp.float32) * 0.1
    bias = jax.random.normal(kb, (NUM_CLASSES,), jnp.float32) * 0.01

    out = multi_class_perturbator(x, weight, bias, PERTURBATIONS, PERT_RATIO, kn)
    jax.block_until_ready(out)
    assert out.shape == (N, NUM_CLASSES, H, W)

    # Pure-JAX reference using the identical host-drawn noise (elementwise only,
    # so no matmul-precision wiggle on TPU).
    hw = H * W
    x_flat = x.reshape(N, C_IN, hw)
    noise, scat = _host_noise_and_scatter(kn, PERTURBATIONS, NUM_CLASSES,
                                          N, hw, PERT_RATIO)
    ref = bias.astype(jnp.float32)[None, :, None]
    for c in range(C_IN):
        ref = ref + weight[None, :, c:c + 1] * x_flat[:, c:c + 1, :]
    for k in range(noise.shape[1]):
        ref = ref + scat[None, :, k:k + 1] * noise[:, k:k + 1, :]
    assert jnp.allclose(out.reshape(N, NUM_CLASSES, hw), ref,
                        rtol=1e-5, atol=1e-5), "kernel mismatch vs reference"

    print("KERNEL_OK")
</pallas_src>

<mosaic_0001>
module attributes {stable_mosaic.version = 11 : i64} {
  func.func @_perturbator_kernel(%arg0: i32, %arg1: i32, %arg2: memref<1x4x256xf32, #tpu.memory_space<vmem>>, %arg3: memref<8x4xf32, #tpu.memory_space<vmem>>, %arg4: memref<8x1xf32, #tpu.memory_space<vmem>>, %arg5: memref<8x2xf32, #tpu.memory_space<vmem>>, %arg6: memref<1x2x256xf32, #tpu.memory_space<vmem>>, %arg7: memref<1x8x256xf32, #tpu.memory_space<vmem>>) attributes {dimension_semantics = [#tpu.dimension_semantics<parallel>, #tpu.dimension_semantics<parallel>], iteration_bounds = array<i64: 2, 1>, scalar_prefetch = 0 : i64, scratch_operands = 0 : i64, tpu.core_type = #tpu.core_type<tc>, window_params = [{transform_indices = @transform_0, window_bounds = array<i64: 1, 4, 256>}, {pipeline_mode = #tpu.pipeline_mode<synchronous>, transform_indices = @transform_1, window_bounds = array<i64: 8, 4>}, {pipeline_mode = #tpu.pipeline_mode<synchronous>, transform_indices = @transform_2, window_bounds = array<i64: 8, 1>}, {pipeline_mode = #tpu.pipeline_mode<synchronous>, transform_indices = @transform_3, window_bounds = array<i64: 8, 2>}, {transform_indices = @transform_4, window_bounds = array<i64: 1, 2, 256>}, {transform_indices = @transform_5, window_bounds = array<i64: 1, 8, 256>}]} {
    %c0 = arith.constant 0 : index
    %c0_0 = arith.constant 0 : index
    %c0_1 = arith.constant 0 : index
    %0 = vector.load %arg2[%c0, %c0_0, %c0_1] : memref<1x4x256xf32, #tpu.memory_space<vmem>>, vector<1x4x256xf32>
    %1 = vector.shape_cast %0 : vector<1x4x256xf32> to vector<4x256xf32>
    %c0_2 = arith.constant 0 : index
    %c0_3 = arith.constant 0 : index
    %2 = vector.load %arg3[%c0_2, %c0_3] : memref<8x4xf32, #tpu.memory_space<vmem>>, vector<8x4xf32>
    %3 = vector.extract_strided_slice %2 {offsets = [0, 0], sizes = [8, 1], strides = [1, 1]} : vector<8x4xf32> to vector<8x1xf32>
    %4 = vector.extract_strided_slice %1 {offsets = [0, 0], sizes = [1, 256], strides = [1, 1]} : vector<4x256xf32> to vector<1x256xf32>
    %5 = vector.broadcast %3 : vector<8x1xf32> to vector<8x256xf32>
    %6 = vector.broadcast %4 : vector<1x256xf32> to vector<8x256xf32>
    %7 = arith.mulf %5, %6 : vector<8x256xf32>
    %8 = vector.extract_strided_slice %2 {offsets = [0, 1], sizes = [8, 1], strides = [1, 1]} : vector<8x4xf32> to vector<8x1xf32>
    %9 = vector.extract_strided_slice %1 {offsets = [1, 0], sizes = [1, 256], strides = [1, 1]} : vector<4x256xf32> to vector<1x256xf32>
    %10 = vector.broadcast %8 : vector<8x1xf32> to vector<8x256xf32>
    %11 = vector.broadcast %9 : vector<1x256xf32> to vector<8x256xf32>
    %12 = arith.mulf %10, %11 : vector<8x256xf32>
    %13 = arith.addf %7, %12 : vector<8x256xf32>
    %14 = vector.extract_strided_slice %2 {offsets = [0, 2], sizes = [8, 1], strides = [1, 1]} : vector<8x4xf32> to vector<8x1xf32>
    %15 = vector.extract_strided_slice %1 {offsets = [2, 0], sizes = [1, 256], strides = [1, 1]} : vector<4x256xf32> to vector<1x256xf32>
    %16 = vector.broadcast %14 : vector<8x1xf32> to vector<8x256xf32>
    %17 = vector.broadcast %15 : vector<1x256xf32> to vector<8x256xf32>
    %18 = arith.mulf %16, %17 : vector<8x256xf32>
    %19 = arith.addf %13, %18 : vector<8x256xf32>
    %20 = vector.extract_strided_slice %2 {offsets = [0, 3], sizes = [8, 1], strides = [1, 1]} : vector<8x4xf32> to vector<8x1xf32>
    %21 = vector.extract_strided_slice %1 {offsets = [3, 0], sizes = [1, 256], strides = [1, 1]} : vector<4x256xf32> to vector<1x256xf32>
    %22 = vector.broadcast %20 : vector<8x1xf32> to vector<8x256xf32>
    %23 = vector.broadcast %21 : vector<1x256xf32> to vector<8x256xf32>
    %24 = arith.mulf %22, %23 : vector<8x256xf32>
    %25 = arith.addf %19, %24 : vector<8x256xf32>
    %c0_4 = arith.constant 0 : index
    %c0_5 = arith.constant 0 : index
    %26 = vector.load %arg4[%c0_4, %c0_5] : memref<8x1xf32, #tpu.memory_space<vmem>>, vector<8x1xf32>
    %27 = vector.broadcast %26 : vector<8x1xf32> to vector<8x256xf32>
    %28 = arith.addf %25, %27 : vector<8x256xf32>
    %c0_6 = arith.constant 0 : index
    %c0_7 = arith.constant 0 : index
    %c0_8 = arith.constant 0 : index
    %29 = vector.load %arg6[%c0_6, %c0_7, %c0_8] : memref<1x2x256xf32, #tpu.memory_space<vmem>>, vector<1x2x256xf32>
    %30 = vector.shape_cast %29 : vector<1x2x256xf32> to vector<2x256xf32>
    %c0_9 = arith.constant 0 : index
    %c0_10 = arith.constant 0 : index
    %31 = vector.load %arg5[%c0_9, %c0_10] : memref<8x2xf32, #tpu.memory_space<vmem>>, vector<8x1xf32>
    %32 = vector.extract_strided_slice %30 {offsets = [0, 0], sizes = [1, 256], strides = [1, 1]} : vector<2x256xf32> to vector<1x256xf32>
    %33 = vector.broadcast %31 : vector<8x1xf32> to vector<8x256xf32>
    %34 = vector.broadcast %32 : vector<1x256xf32> to vector<8x256xf32>
    %35 = arith.mulf %33, %34 : vector<8x256xf32>
    %36 = arith.addf %28, %35 : vector<8x256xf32>
    %c0_11 = arith.constant 0 : index
    %c1 = arith.constant 1 : index
    %37 = vector.load %arg5[%c0_11, %c1] : memref<8x2xf32, #tpu.memory_space<vmem>>, vector<8x1xf32>
    %38 = vector.extract_strided_slice %30 {offsets = [1, 0], sizes = [1, 256], strides = [1, 1]} : vector<2x256xf32> to vector<1x256xf32>
    %39 = vector.broadcast %37 : vector<8x1xf32> to vector<8x256xf32>
    %40 = vector.broadcast %38 : vector<1x256xf32> to vector<8x256xf32>
    %41 = arith.mulf %39, %40 : vector<8x256xf32>
    %42 = arith.addf %36, %41 : vector<8x256xf32>
    %c0_12 = arith.constant 0 : index
    %c0_13 = arith.constant 0 : index
    %c0_14 = arith.constant 0 : index
    %43 = vector.load %arg7[%c0_12, %c0_13, %c0_14] : memref<1x8x256xf32, #tpu.memory_space<vmem>>, vector<1x8x256xf32>
    %44 = vector.shape_cast %43 : vector<1x8x256xf32> to vector<8x256xf32>
    %45 = vector.shape_cast %42 : vector<8x256xf32> to vector<1x8x256xf32>
    tpu.vector_store %arg7[%c0_12, %c0_13, %c0_14], %45 {strides = array<i32>} : memref<1x8x256xf32, #tpu.memory_space<vmem>>, vector<1x8x256xf32>,
    return
  }
  func.func @transform_0(%arg0: i32, %arg1: i32) -> (i32, i32, i32) {
    %c0_i32 = arith.constant 0 : i32
    %c0_i32_0 = arith.constant 0 : i32
    return %arg0, %c0_i32, %arg1 : i32, i32, i32
  }
  func.func @transform_1(%arg0: i32, %arg1: i32) -> (i32, i32) {
    %c0_i32 = arith.constant 0 : i32
    %c0_i32_0 = arith.constant 0 : i32
    %c0_i32_1 = arith.constant 0 : i32
    return %c0_i32, %c0_i32_0 : i32, i32
  }
  func.func @transform_2(%arg0: i32, %arg1: i32) -> (i32, i32) {
    %c0_i32 = arith.constant 0 : i32
    %c0_i32_0 = arith.constant 0 : i32
    %c0_i32_1 = arith.constant 0 : i32
    return %c0_i32, %c0_i32_0 : i32, i32
  }
  func.func @transform_3(%arg0: i32, %arg1: i32) -> (i32, i32) {
    %c0_i32 = arith.constant 0 : i32
    %c0_i32_0 = arith.constant 0 : i32
    %c0_i32_1 = arith.constant 0 : i32
    return %c0_i32, %c0_i32_0 : i32, i32
  }
  func.func @transform_4(%arg0: i32, %arg1: i32) -> (i32, i32, i32) {
    %c0_i32 = arith.constant 0 : i32
    %c0_i32_0 = arith.constant 0 : i32
    return %arg0, %c0_i32, %arg1 : i32, i32, i32
  }
  func.func @transform_5(%arg0: i32, %arg1: i32) -> (i32, i32, i32) {
    %c0_i32 = arith.constant 0 : i32
    %c0_i32_0 = arith.constant 0 : i32
    return %arg0, %c0_i32, %arg1 : i32, i32, i32
  }
}

</mosaic_0001>

<llo_original>
// kernel: tpu_custom_call.1
$region0: #{tpu_custom_call.1}
  #allocation0 [shape = 'u32[]', space=smem, size = 0x4, offset = 0x4, fixed_abs, tag = 'smem constant byte address 0x4 - core index']
  #allocation1 [shape = 'u32[72,128]{1,0:T(1,128)}', space=vmem, size = 0x9000, scoped, tag = 'internal scratch']
  %s0 = inlined_call_operand.vmem [shape: f32[2,4,256], index: 0, kind: input, shape index: {}]
  %s1 = inlined_call_operand.vmem [shape: f32[8,4], index: 1, kind: input, shape index: {}]
  %s2 = inlined_call_operand.vmem [shape: f32[8,1], index: 2, kind: input, shape index: {}]
  %s3 = inlined_call_operand.vmem [shape: f32[8,2], index: 3, kind: input, shape index: {}]
  %s4 = inlined_call_operand.vmem [shape: f32[2,2,256], index: 4, kind: input, shape index: {}]
  %s5 = inlined_call_operand.hbm [shape: f32[2,8,256], index: 5, kind: output, shape index: {}]
  %s6 = sld [smem:[#allocation0]]
  $region53: #{tpu_custom_call.1} parent=0
    _
  %s8 = ssub.s32 1, %s6
  %s9 = scalar_select 0, %s8, %s6
  $region1: #{tpu_custom_call.1} parent=0
    #allocation2 [shape = 'u8[16384]{0}', space=vmem, size = 0x4000, scoped, tag = 'output window, operand 0']
    #allocation3 [shape = 's32[2]{0}', space=sflag, size = 0x8, scoped, tag = 'scoped memory for tpu_custom_call.1']
    %10 = vsyncpa [#allocation3], 0
    %s11 = scalar_lea.sflag [#allocation3], 1
    %12 = vsyncpa %s11, 0
    loop: start=0, step=1, limit=4
    $region2: #{tpu_custom_call.1} parent=1 // loop_pre_header
      _
    $region3: #{tpu_custom_call.1} parent=1 // loop_header
      %s14 = sphi 0, %s18
      %p15 = scmp.ge.s32.totalorder %s14, 4
      %s21 = sphi 0, %s33
      %s22 = sphi 0, %s29
      %s23 = sphi 0, %s21
      %s24 = sphi 0, %s22
      %s25 = sphi 0, %s23
      %s26 = sphi 0, %s24
      %s38 = sphi 0, %s40
      %s41 = sphi 0, %s38
      %s42 = sphi 0, %s41
      %s58 = sphi 0, %s42
      %s62 = sphi 0, %s62
      %s64 = sphi 0, %s62
      %s65 = sphi 0, %s64
      %s79 = sphi 0, %s65
      %s83 = sphi 0, %s83
      %s85 = sphi 0, %s83
      %s86 = sphi 0, %s85
      %s100 = sphi 0, %s86
      %s104 = sphi 0, %s104
      %s106 = sphi 0, %s104
      %s107 = sphi 0, %s106
      %s121 = sphi 0, %s107
      %s129 = sphi 0, %s131
      %s132 = sphi 0, %s129
      %s133 = sphi 0, %s132
      %s149 = sphi 0, %s133
      %s157 = sphi 0, %s159
      %s160 = sphi 0, %s157
      %s161 = sphi 0, %s160
      %s177 = sphi 0, %s161
    $region4: #{tpu_custom_call.1} parent=1 // loop_header_branch
      %17 = sbr.rel (%p15) target = $region8
    $region5: #{tpu_custom_call.1} parent=1 // loop_body
      %s19 = ssub.s32 %s14, 1
      %s20 = ssub.s32 %s14, 2
      %s27 = sadd.s32 1, %s22
      %p28 = scmp.ge.s32.totalorder %s27, 1
      %s29 = scalar_select %p28, 0, %s27
      %s30 = sadd.s32 1, %s21
      %s31 = scalar_select %p28, %s30, %s21
      %p32 = scmp.ge.s32.totalorder %s31, 2
      %s33 = scalar_select %p32, 0, %s31
      %s34 = ssub.s32 %s21, %s33
      %s35 = ssub.s32 %s22, %s29
      %s36 = sor.u32 %s34, %s35
      %p37 = scmp.eq.s32.totalorder %s36, 0
      %s39 = sadd.s32 %s38, 1
      %s40 = scalar_select %p37, %s38, %s39
      %p43 = pneg %p37
      %p44 = scmp.eq.s32.totalorder %s14, 1
      %p45 = por %p43, %p44
      %p46 = scmp.ne.s32.totalorder %s38, %s41
      %p47 = scmp.eq.s32.totalorder %s14, 0
      %p48 = por %p46, %p47
      %p49 = scmp.ne.s32.totalorder %s38, %s41
      %p50 = scmp.eq.s32.totalorder %s19, 1
      %p51 = por %p49, %p50
      %p52 = scmp.ne.s32.totalorder %s41, %s42
      %p53 = scmp.eq.s32.totalorder %s19, 0
      %p54 = por %p52, %p53
      %p55 = scmp.ne.s32.totalorder %s41, %s42
      %p56 = scmp.eq.s32.totalorder %s20, 1
      %p57 = por %p55, %p56
      %p59 = scmp.ne.s32.totalorder %s42, %s58
      %p60 = scmp.eq.s32.totalorder %s20, 0
      %p61 = por %p59, %p60
      %s63 = sadd.s32 %s62, 1
      %p66 = scmp.eq.s32.totalorder %s14, 1
      %p67 = scmp.ne.s32.totalorder %s62, %s64
      %p68 = scmp.eq.s32.totalorder %s14, 0
      %p69 = por %p67, %p68
      %p70 = scmp.ne.s32.totalorder %s62, %s64
      %p71 = scmp.eq.s32.totalorder %s19, 1
      %p72 = por %p70, %p71
      %p73 = scmp.ne.s32.totalorder %s64, %s65
      %p74 = scmp.eq.s32.totalorder %s19, 0
      %p75 = por %p73, %p74
      %p76 = scmp.ne.s32.totalorder %s64, %s65
      %p77 = scmp.eq.s32.totalorder %s20, 1
      %p78 = por %p76, %p77
      %p80 = scmp.ne.s32.totalorder %s65, %s79
      %p81 = scmp.eq.s32.totalorder %s20, 0
      %p82 = por %p80, %p81
      %s84 = sadd.s32 %s83, 1
      %p87 = scmp.eq.s32.totalorder %s14, 1
      %p88 = scmp.ne.s32.totalorder %s83, %s85
      %p89 = scmp.eq.s32.totalorder %s14, 0
      %p90 = por %p88, %p89
      %p91 = scmp.ne.s32.totalorder %s83, %s85
      %p92 = scmp.eq.s32.totalorder %s19, 1
      %p93 = por %p91, %p92
      %p94 = scmp.ne.s32.totalorder %s85, %s86
      %p95 = scmp.eq.s32.totalorder %s19, 0
      %p96 = por %p94, %p95
      %p97 = scmp.ne.s32.totalorder %s85, %s86
      %p98 = scmp.eq.s32.totalorder %s20, 1
      %p99 = por %p97, %p98
      %p101 = scmp.ne.s32.totalorder %s86, %s100
      %p102 = scmp.eq.s32.totalorder %s20, 0
      %p103 = por %p101, %p102
      %s105 = sadd.s32 %s104, 1
      %p108 = scmp.eq.s32.totalorder %s14, 1
      %p109 = scmp.ne.s32.totalorder %s104, %s106
      %p110 = scmp.eq.s32.totalorder %s14, 0
      %p111 = por %p109, %p110
      %p112 = scmp.ne.s32.totalorder %s104, %s106
      %p113 = scmp.eq.s32.totalorder %s19, 1
      %p114 = por %p112, %p113
      %p115 = scmp.ne.s32.totalorder %s106, %s107
      %p116 = scmp.eq.s32.totalorder %s19, 0
      %p117 = por %p115, %p116
      %p118 = scmp.ne.s32.totalorder %s106, %s107
      %p119 = scmp.eq.s32.totalorder %s20, 1
      %p120 = por %p118, %p119
      %p122 = scmp.ne.s32.totalorder %s107, %s121
      %p123 = scmp.eq.s32.totalorder %s20, 0
      %p124 = por %p122, %p123
      %s125 = ssub.s32 %s21, %s33
      %s126 = ssub.s32 %s22, %s29
      %s127 = sor.u32 %s125, %s126
      %p128 = scmp.eq.s32.totalorder %s127, 0
      %s130 = sadd.s32 %s129, 1
      %s131 = scalar_select %p128, %s129, %s130
      %p134 = pneg %p128
      %p135 = scmp.eq.s32.totalorder %s14, 1
      %p136 = por %p134, %p135
      %p137 = scmp.ne.s32.totalorder %s129, %s132
      %p138 = scmp.eq.s32.totalorder %s14, 0
      %p139 = por %p137, %p138
      %p140 = scmp.ne.s32.totalorder %s129, %s132
      %p141 = scmp.eq.s32.totalorder %s19, 1
      %p142 = por %p140, %p141
      %p143 = scmp.ne.s32.totalorder %s132, %s133
      %p144 = scmp.eq.s32.totalorder %s19, 0
      %p145 = por %p143, %p144
      %p146 = scmp.ne.s32.totalorder %s132, %s133
      %p147 = scmp.eq.s32.totalorder %s20, 1
      %p148 = por %p146, %p147
      %p150 = scmp.ne.s32.totalorder %s133, %s149
      %p151 = scmp.eq.s32.totalorder %s20, 0
      %p152 = por %p150, %p151
      %s153 = ssub.s32 %s21, %s33
      %s154 = ssub.s32 %s22, %s29
      %s155 = sor.u32 %s153, %s154
      %p156 = scmp.eq.s32.totalorder %s155, 0
      %s158 = sadd.s32 %s157, 1
      %s159 = scalar_select %p156, %s157, %s158
      %p162 = pneg %p156
      %p163 = scmp.eq.s32.totalorder %s14, 1
      %p164 = por %p162, %p163
      %p165 = scmp.ne.s32.totalorder %s157, %s160
      %p166 = scmp.eq.s32.totalorder %s14, 0
      %p167 = por %p165, %p166
      %p168 = scmp.ne.s32.totalorder %s157, %s160
      %p169 = scmp.eq.s32.totalorder %s19, 1
      %p170 = por %p168, %p169
      %p171 = scmp.ne.s32.totalorder %s160, %s161
      %p172 = scmp.eq.s32.totalorder %s19, 0
      %p173 = por %p171, %p172
      %p174 = scmp.ne.s32.totalorder %s160, %s161
      %p175 = scmp.eq.s32.totalorder %s20, 1
      %p176 = por %p174, %p175
      %p178 = scmp.ne.s32.totalorder %s161, %s177
      %p179 = scmp.eq.s32.totalorder %s20, 0
      %p180 = por %p178, %p179
      %p181 = scmp.le.s32.totalorder 1, %s14
      %p182 = scmp.lt.s32.totalorder %s14, 3
      %p183 = pnand %p181, %p182
      %p184 = pneg %p183
      // Predicated region
      $region9: #{tpu_custom_call.1} parent=5 // pred_check
        _
      $region10: #{tpu_custom_call.1} parent=5 // pred_check_branch
        %186 = sbr.rel (%p183) target = $region12
      $region11: #{tpu_custom_call.1} parent=5 // pred_region
        %s187 = ssub.s32 %s14, 1
        // Predicated region
        $region13: #{tpu_custom_call.1} parent=11 // pred_check
          %p188 = pneg %p75
        $region14: #{tpu_custom_call.1} parent=11 // pred_check_branch
          %190 = sbr.rel (%p188) target = $region16
        $region15: #{tpu_custom_call.1} parent=11 // pred_region
          _
        $region16: #{tpu_custom_call.1} parent=11 // pred_fallthru
          _
        // Predicated region
        $region17: #{tpu_custom_call.1} parent=11 // pred_check
          %p191 = pneg %p96
        $region18: #{tpu_custom_call.1} parent=11 // pred_check_branch
          %193 = sbr.rel (%p191) target = $region20
        $region19: #{tpu_custom_call.1} parent=11 // pred_region
          _
        $region20: #{tpu_custom_call.1} parent=11 // pred_fallthru
          _
        // Predicated region
        $region21: #{tpu_custom_call.1} parent=11 // pred_check
          %p194 = pneg %p117
        $region22: #{tpu_custom_call.1} parent=11 // pred_check_branch
          %196 = sbr.rel (%p194) target = $region24
        $region23: #{tpu_custom_call.1} parent=11 // pred_region
          _
        $region24: #{tpu_custom_call.1} parent=11 // pred_fallthru
          _
      $region12: #{tpu_custom_call.1} parent=5 // pred_fallthru
        _
      %p197 = scmp.lt.s32.totalorder %s14, 2
      // Predicated region
      $region25: #{tpu_custom_call.1} parent=5 // pred_check
        %p198 = pneg %p197
      $region26: #{tpu_custom_call.1} parent=5 // pred_check_branch
        %200 = sbr.rel (%p198) target = $region28
      $region27: #{tpu_custom_call.1} parent=5 // pred_region
        // Predicated region
        $region29: #{tpu_custom_call.1} parent=27 // pred_check
          %p201 = pneg %p48
        $region30: #{tpu_custom_call.1} parent=27 // pred_check_branch
          %203 = sbr.rel (%p201) target = $region32
        $region31: #{tpu_custom_call.1} parent=27 // pred_region
          %s204 = smul.u32 2, %s22
          %p205 = scmp.lt.s32.totalorder %s21, 1
          %s206 = scalar_select %p205, %s21, 1
          %p207 = scmp.lt.s32.totalorder %s204, 1
          %s208 = scalar_select %p207, %s204, 1
          %s209 = smul.addr %s206, 2
          %s210 = sadd.s32 %s208, %s209
          %s211 = smul.addr %s210, 4
          %s212 = scalar_lea.vmem %s0, %s211
          %s213 = smul.u32 2, %s22
        $region32: #{tpu_custom_call.1} parent=27 // pred_fallthru
          _
        // Predicated region
        $region33: #{tpu_custom_call.1} parent=27 // pred_check
          %p214 = pneg %p139
        $region34: #{tpu_custom_call.1} parent=27 // pred_check_branch
          %216 = sbr.rel (%p214) target = $region36
        $region35: #{tpu_custom_call.1} parent=27 // pred_region
          %s217 = smul.u32 2, %s22
          %p218 = scmp.lt.s32.totalorder %s21, 1
          %s219 = scalar_select %p218, %s21, 1
          %p220 = scmp.lt.s32.totalorder %s217, 1
          %s221 = scalar_select %p220, %s217, 1
          %s222 = smul.addr %s219, 2
          %s223 = sadd.s32 %s221, %s222
          %s224 = smul.addr %s223, 2
          %s225 = scalar_lea.vmem %s4, %s224
          %s226 = smul.u32 2, %s22
        $region36: #{tpu_custom_call.1} parent=27 // pred_fallthru
          _
      $region28: #{tpu_custom_call.1} parent=5 // pred_fallthru
        _
      %p227 = scmp.le.s32.totalorder 1, %s14
      %p228 = scmp.lt.s32.totalorder %s14, 3
      %p229 = pnand %p227, %p228
      %p230 = pneg %p229
      // Predicated region
      $region37: #{tpu_custom_call.1} parent=5 // pred_check
        _
      $region38: #{tpu_custom_call.1} parent=5 // pred_check_branch
        %232 = sbr.rel (%p229) target = $region40
      $region39: #{tpu_custom_call.1} parent=5 // pred_region
        %s233 = ssub.s32 %s14, 1
        %s234 = smul.u32 2, %s24
        %p235 = scmp.lt.s32.totalorder %s23, 1
        %s236 = scalar_select %p235, %s23, 1
        %p237 = scmp.lt.s32.totalorder %s234, 1
        %s238 = scalar_select %p237, %s234, 1
        %s239 = smul.addr %s236, 2
        %s240 = sadd.s32 %s238, %s239
        %s241 = smul.addr %s240, 4
        %s242 = scalar_lea.vmem %s0, %s241
        %p243 = pneg %p54
        %p244 = pneg %p51
        %p245 = pneg %p75
        %p246 = pneg %p72
        %p247 = pneg %p96
        %p248 = pneg %p93
        %p249 = pneg %p117
        %p250 = pneg %p114
        %s251 = smul.u32 2, %s24
        %p252 = scmp.lt.s32.totalorder %s23, 1
        %s253 = scalar_select %p252, %s23, 1
        %p254 = scmp.lt.s32.totalorder %s251, 1
        %s255 = scalar_select %p254, %s251, 1
        %s256 = smul.addr %s253, 2
        %s257 = sadd.s32 %s255, %s256
        %s258 = smul.addr %s257, 2
        %s259 = scalar_lea.vmem %s4, %s258
        %p260 = pneg %p145
        %p261 = pneg %p142
        %p262 = pneg %p173
        %p263 = pneg %p170
        %s264 = sand.u32 %s160, 1
        %s265 = scalar_lea.sflag [#allocation3], %s264
        %s266 = sand.u32 %s160, 1
        %s267 = smul.addr %s266, 16
        %s268 = scalar_lea.vmem [#allocation2], %s267
        %s269 = smul.u32 2, %s24
        %p270 = scmp.lt.s32.totalorder %s23, 1
        %s271 = scalar_select %p270, %s23, 1
        %p272 = scmp.lt.s32.totalorder %s269, 1
        %s273 = scalar_select %p272, %s269, 1
        %s274 = smul.addr %s271, 2
        %s275 = sadd.s32 %s273, %s274
        %s276 = smul.addr %s275, 4
        %s277 = scalar_lea.vmem %s0, %s276
        %s278 = smul.u32 2, %s24
        %s279 = smul.u32 2, %s24
        %p280 = scmp.lt.s32.totalorder %s23, 1
        %s281 = scalar_select %p280, %s23, 1
        %p282 = scmp.lt.s32.totalorder %s279, 1
        %s283 = scalar_select %p282, %s279, 1
        %s284 = smul.addr %s281, 2
        %s285 = sadd.s32 %s283, %s284
        %s286 = smul.addr %s285, 2
        %s287 = scalar_lea.vmem %s4, %s286
        %s288 = smul.u32 2, %s24
        %s289 = smul.u32 2, %s24
        %v290 = vld [vmem:[%s277] sm:$0xff]
        %v291 = vld [vmem:[%s1] sm:$0xff]
        %293 = vset.pattern.permute.xlu0 0
        %294 = vperm.xlu0 %293, %v291
        %v295 = vpop.permute.xlu0 %294
        %v298 = vperm.slane %v290, 0
        %v299 = vperm.slane %v290, 4
        %v302 = vperm.slane %v298, 0
        %v303 = vperm.slane %v299, 0
        %v304 = vmul.f32 %v295, %v302
        %v305 = vmul.f32 %v295, %v303
        %306 = vset.pattern.permute.xlu0 1
        %307 = vperm.xlu0 %306, %v291
        %v308 = vpop.permute.xlu0 %307
        %v310 = vperm.slane %v290, 1
        %v311 = vperm.slane %v290, 5
        %v314 = vperm.slane %v310, 1
        %v315 = vperm.slane %v311, 1
        %v316 = vmul.f32 %v308, %v314
        %v317 = vmul.f32 %v308, %v315
        %v318 = vadd.f32 %v304, %v316
        %v319 = vadd.f32 %v305, %v317
        %320 = vset.pattern.permute.xlu0 2
        %321 = vperm.xlu0 %320, %v291
        %v322 = vpop.permute.xlu0 %321
        %v324 = vperm.slane %v290, 2
        %v325 = vperm.slane %v290, 6
        %v328 = vperm.slane %v324, 2
        %v329 = vperm.slane %v325, 2
        %v330 = vmul.f32 %v322, %v328
        %v331 = vmul.f32 %v322, %v329
        %v332 = vadd.f32 %v318, %v330
        %v333 = vadd.f32 %v319, %v331
        %334 = vset.pattern.permute.xlu0 3
        %335 = vperm.xlu0 %334, %v291
        %v336 = vpop.permute.xlu0 %335
        %v338 = vperm.slane %v290, 3
        %v339 = vperm.slane %v290, 7
        %v342 = vperm.slane %v338, 3
        %v343 = vperm.slane %v339, 3
        %v344 = vmul.f32 %v336, %v342
        %v345 = vmul.f32 %v336, %v343
        %v346 = vadd.f32 %v332, %v344
        %v347 = vadd.f32 %v333, %v345
        %v348 = vld [vmem:[%s2] sm:$0xff]
        %350 = vset.pattern.permute.xlu0 0
        %351 = vperm.xlu0 %350, %v348
        %v352 = vpop.permute.xlu0 %351
        %v354 = vadd.f32 %v346, %v352
        %v355 = vadd.f32 %v347, %v352
        %v356 = vld [vmem:[%s287] sm:$0xf]
        %v357 = vld [vmem:[%s3] sm:$0xff]
        %359 = vset.pattern.permute.xlu0 0
        %360 = vperm.xlu0 %359, %v357
        %v361 = vpop.permute.xlu0 %360
        %v364 = vperm.slane %v356, 0
        %v365 = vperm.slane %v356, 2
        %v368 = vperm.slane %v364, 0
        %v369 = vperm.slane %v365, 0
        %v370 = vmul.f32 %v361, %v368
        %v371 = vmul.f32 %v361, %v369
        %v372 = vadd.f32 %v354, %v370
        %v373 = vadd.f32 %v355, %v371
        %374 = vset.pattern.permute.xlu0 1
        %375 = vperm.xlu0 %374, %v357
        %v376 = vpop.permute.xlu0 %375
        %v378 = vperm.slane %v356, 1
        %v379 = vperm.slane %v356, 3
        %v382 = vperm.slane %v378, 1
        %v383 = vperm.slane %v379, 1
        %v384 = vmul.f32 %v376, %v382
        %v385 = vmul.f32 %v376, %v383
        %v386 = vadd.f32 %v372, %v384
        %v387 = vadd.f32 %v373, %v385
        %388 = vst [vmem:[%s268] sm:$0xff] %v386
        %389 = vst [vmem:[%s268 + $0x8] sm:$0xff] %v387
        %s390 = sand.u32 %s160, 1
        %s391 = scalar_lea.sflag [#allocation3], %s390
        %s392 = sand.u32 %s160, 1
        %s393 = smul.addr %s392, 16
        %s394 = scalar_lea.vmem [#allocation2], %s393
        // Predicated region
        $region41: #{tpu_custom_call.1} parent=39 // pred_check
          %p395 = pneg %p170
        $region42: #{tpu_custom_call.1} parent=39 // pred_check_branch
          %397 = sbr.rel (%p395) target = $region44
        $region43: #{tpu_custom_call.1} parent=39 // pred_region
          %s398 = smul.u32 2, %s24
          %400 = vsyncadd %s391, 0
          %s401 = smul.addr %s23, 2
          %s402 = sadd.s32 %s398, %s401
          %s403 = smul.addr %s402, 8
          %s404 = scalar_lea.hbm %s5, %s403
          %s406 = sshll.u32 %s394, 4
          %s407 = int_to_ptr.vmem [resolvable:$true] %s406
          %s408 = sshll.u32 %s404, 4
          %s409 = int_to_ptr.hbm [resolvable:$true] %s408
          %411 = dma.vmem_to_hbm [thread:$0]  %s407, 256, %s409, %s391
        $region44: #{tpu_custom_call.1} parent=39 // pred_fallthru
          _
      $region40: #{tpu_custom_call.1} parent=5 // pred_fallthru
        _
      %p412 = scmp.le.s32.totalorder 2, %s14
      // Predicated region
      $region45: #{tpu_custom_call.1} parent=5 // pred_check
        %p413 = pneg %p412
      $region46: #{tpu_custom_call.1} parent=5 // pred_check_branch
        %415 = sbr.rel (%p413) target = $region48
      $region47: #{tpu_custom_call.1} parent=5 // pred_region
        %s416 = ssub.s32 %s14, 2
        // Predicated region
        $region49: #{tpu_custom_call.1} parent=47 // pred_check
          %p417 = pneg %p176
        $region50: #{tpu_custom_call.1} parent=47 // pred_check_branch
          %419 = sbr.rel (%p417) target = $region52
        $region51: #{tpu_custom_call.1} parent=47 // pred_region
          %s420 = sand.u32 %s161, 1
          %s421 = scalar_lea.sflag [#allocation3], %s420
          %s422 = sand.u32 %s161, 1
          %s423 = smul.addr %s422, 16
          %s424 = scalar_lea.vmem [#allocation2], %s423
          %426 = dma.done %s421, 256
        $region52: #{tpu_custom_call.1} parent=47 // pred_fallthru
          _
      $region48: #{tpu_custom_call.1} parent=5 // pred_fallthru
        _
    $region6: #{tpu_custom_call.1} parent=1 // loop_footer
      %s18 = sadd.s32 1, %s14
    $region7: #{tpu_custom_call.1} parent=1 // loop_footer_branch
      %13 = sbr.rel target = $region3
    $region8: #{tpu_custom_call.1} parent=1 // loop_exit
      _
    %427 = vsyncpa [#allocation3], 1
    %s428 = scalar_lea.sflag [#allocation3], 1
    %429 = vsyncpa %s428, 1

</llo_original>
